<compile_context>
chip_gen: v5e
topology: v5e:2x2
jax: 0.10.0
libtpu: 0.0.40
codegen_flags: <defaults>
</compile_context>

<pallas_src>
import jax
import jax.numpy as jnp
import numpy as np
from jax.experimental import pallas as pl
from jax.experimental.pallas import tpu as pltpu


def _round_up(x, m):
    return ((x + m - 1) // m) * m


def _vmem_budget_bytes():
    """Scoped-VMEM budget: 3/4 of physical VMEM, capped at 96 MiB.

    v5e/v6e (128 MiB physical) -> 96 MiB, v7x (64 MiB physical) -> 48 MiB.
    Falls back to the conservative 48 MiB if the query is unavailable.
    """
    phys = 64 * 1024 * 1024
    try:
        phys = getattr(pltpu.get_tpu_info(), "vmem_capacity_bytes", phys)
    except Exception:
        pass
    return int(min(96 * 1024 * 1024, (phys * 3) // 4))


def _pick_tile(dim_padded, preferred, align, max_waste_frac=0.10):
    """Largest tile <= preferred (multiple of `align`) keeping the round-up
    padding waste below ~max_waste_frac (avoids up-to-2x wasted MXU work)."""
    if dim_padded <= preferred:
        return dim_padded
    best_t = preferred
    best_waste = _round_up(dim_padded, best_t) - dim_padded
    t = preferred
    while t - align >= align and best_waste > max_waste_frac * dim_padded:
        t -= align
        waste = _round_up(dim_padded, t) - dim_padded
        if waste < best_waste:
            best_t, best_waste = t, waste
    return best_t


# ---------------------------------------------------------------- kernels ---

def _linear_kernel_f32_out(x_ref, w_ref, b_ref, o_ref):
    """f32 output: accumulate straight into the resident output block.

    The output block index is constant across the k axis, so o_ref stays in
    VMEM for the whole reduction; bias is folded into the k == 0 init so the
    inner loop is a pure MXU accumulate and there is no epilogue copy.
    """
    k = pl.program_id(2)

    @pl.when(k == 0)
    def _():
        o_ref[...] = jnp.broadcast_to(b_ref[...].astype(jnp.float32),
                                      o_ref.shape)

    o_ref[...] += jnp.dot(x_ref[...], w_ref[...],
                          preferred_element_type=jnp.float32)


def _linear_kernel_acc(x_ref, w_ref, b_ref, o_ref, acc_ref):
    """Generic output dtype: f32 VMEM accumulator, bias + cast in epilogue."""
    k = pl.program_id(2)

    @pl.when(k == 0)
    def _():
        acc_ref[...] = jnp.zeros_like(acc_ref)

    acc_ref[...] += jnp.dot(x_ref[...], w_ref[...],
                            preferred_element_type=jnp.float32)

    @pl.when(k == pl.num_programs(2) - 1)
    def _():
        o_ref[...] = (acc_ref[...] + b_ref[...].astype(jnp.float32)
                      ).astype(o_ref.dtype)


# --------------------------------------------------------------- wrappers ---

def prepare_linear(weight, bias, *, tn=1024, tk=1024, compute_dtype=None):
    """One-time parameter prep (hoisted out of the per-forward path).

    weight: (N, K) PyTorch layout (out_features, in_features); bias: (N,).
    Returns the lane-dense transposed + zero-padded weight (K_pad, N_pad),
    padded bias (1, N_pad) in f32, and tiling metadata.
    """
    N, K = weight.shape
    assert bias.shape == (N,)
    if compute_dtype is not None:
        weight = weight.astype(compute_dtype)

    K_pad = _round_up(K, 128)
    N_pad = _round_up(N, 128)
    tk = _pick_tile(K_pad, min(tk, K_pad), 128)
    tn = _pick_tile(N_pad, min(tn, N_pad), 128)
    K_pad = _round_up(K_pad, tk)
    N_pad = _round_up(N_pad, tn)

    w_p = jnp.pad(weight.T, ((0, K_pad - K), (0, N_pad - N)))
    b_p = jnp.pad(bias, (0, N_pad - N)).reshape(1, N_pad).astype(jnp.float32)
    meta = dict(K=K, N=N, K_pad=K_pad, N_pad=N_pad, tn=tn, tk=tk)
    return w_p, b_p, meta


def linear_apply(x, w_p, b_p, meta, *, tm=512, out_dtype=None,
                 compute_dtype=None, interpret=False):
    """x: (M, K) -> (M, N) = x @ W^T + b, using prepared (padded) params."""
    M, K = x.shape
    assert K == meta["K"], "x feature dim must match weight in_features"
    if out_dtype is None:
        out_dtype = x.dtype
    if compute_dtype is not None:
        x = x.astype(compute_dtype)

    K_pad, N_pad, N = meta["K_pad"], meta["N_pad"], meta["N"]
    tn, tk = meta["tn"], meta["tk"]

    x_bytes = np.dtype(x.dtype).itemsize
    w_bytes = np.dtype(w_p.dtype).itemsize
    o_bytes = np.dtype(out_dtype).itemsize
    use_scratch = np.dtype(out_dtype) != np.dtype(np.float32)

    # Sub-32-bit dtypes pack >=2 rows per sublane: align M (and tm) to 16.
    m_align = 8 if x_bytes >= 4 else 16
    M_pad = _round_up(M, m_align)
    tm = _round_up(min(tm, M_pad), m_align)
    tm = _pick_tile(M_pad, tm, m_align)

    # Keep the double-buffered tile footprint inside the scoped-VMEM budget.
    budget = _vmem_budget_bytes()

    def footprint(tm_, tn_, tk_):
        f = 2 * tm_ * tk_ * x_bytes        # x tiles (double buffered)
        f += 2 * tk_ * tn_ * w_bytes       # weight tiles
        f += 2 * tn_ * 4                   # bias tiles
        f += 2 * tm_ * tn_ * o_bytes       # output tiles
        if use_scratch:
            f += tm_ * tn_ * 4             # f32 accumulator
        return f

    while footprint(tm, tn, tk) > budget:
        if tk >= tn and tk >= tm and tk > 128:
            tk //= 2                       # halving a divisor stays a divisor
        elif tn >= tm and tn > 128:
            tn //= 2
        elif tm > m_align:
            tm = max(m_align, _round_up(tm // 2, m_align))
        else:
            break

    M_pad = _round_up(M_pad, tm)

    # v7x megacore: make sure the parallel (i, j) grid has >= 2 points.
    if (M_pad // tm) * (N_pad // tn) == 1 and N_pad >= 256 and N_pad % 256 == 0:
        tn = N_pad // 2

    x_p = jnp.pad(x, ((0, M_pad - M), (0, K_pad - K)))

    grid = (M_pad // tm, N_pad // tn, K_pad // tk)

    flops = 2 * M_pad * N_pad * K_pad
    bytes_accessed = (M_pad * K_pad * x_bytes * (N_pad // tn)   # x per j sweep
                      + K_pad * N_pad * w_bytes * (M_pad // tm)  # w per i sweep
                      + N_pad * 4
                      + M_pad * N_pad * o_bytes)

    kernel = _linear_kernel_acc if use_scratch else _linear_kernel_f32_out
    scratch = [pltpu.VMEM((tm, tn), jnp.float32)] if use_scratch else []

    out_padded = pl.pallas_call(
        kernel,
        out_shape=jax.ShapeDtypeStruct((M_pad, N_pad), out_dtype),
        grid_spec=pltpu.PrefetchScalarGridSpec(
            num_scalar_prefetch=0,
            grid=grid,
            in_specs=[
                # activations: depend on (i, k)
                pl.BlockSpec((tm, tk), lambda i, j, k: (i, k)),
                # weights: depend only on (k, j)
                pl.BlockSpec((tk, tn), lambda i, j, k: (k, j)),
                # bias: depends only on j
                pl.BlockSpec((1, tn), lambda i, j, k: (0, j)),
            ],
            out_specs=pl.BlockSpec((tm, tn), lambda i, j, k: (i, j)),
            scratch_shapes=scratch,
        ),
        compiler_params=pltpu.CompilerParams(
            dimension_semantics=("parallel", "parallel", "arbitrary"),
            vmem_limit_bytes=budget,
        ),
        cost_estimate=pl.CostEstimate(
            flops=flops, transcendentals=0, bytes_accessed=bytes_accessed),
        interpret=interpret,
    )(x_p, w_p, b_p)

    return out_padded[:M, :N]


def linear_forward(x, weight, bias, *, tm=512, tn=1024, tk=1024,
                   out_dtype=None, compute_dtype=None):
    """Convenience one-shot forward.  For repeated forwards prefer
    prepare_linear() once + linear_apply() per call (hoists the weight
    transpose/pad out of the hot path)."""
    w_p, b_p, meta = prepare_linear(weight, bias, tn=tn, tk=tk,
                                    compute_dtype=compute_dtype)
    return linear_apply(x, w_p, b_p, meta, tm=tm, out_dtype=out_dtype,
                        compute_dtype=compute_dtype)


if __name__ == "__main__":
    # Small demo consistent with nn.Linear(input_size, output_size).
    batch = 8
    input_size = 32
    output_size = 16

    key = jax.random.PRNGKey(0)
    kx, kw, kb = jax.random.split(key, 3)

    # Deterministic param init (mimics nn.Linear's U(-1/sqrt(in), 1/sqrt(in))).
    bound = 1.0 / (input_size ** 0.5)
    weight = jax.random.uniform(
        kw, (output_size, input_size), jnp.float32, minval=-bound, maxval=bound
    )
    bias = jax.random.uniform(
        kb, (output_size,), jnp.float32, minval=-bound, maxval=bound
    )
    x = jax.random.normal(kx, (batch, input_size), jnp.float32)

    # Prepare the (transposed, padded) weight once; jit the per-call path so
    # XLA fuses/elides the activation padding around the pallas_call.
    w_p, b_p, meta = prepare_linear(weight, bias)
    fwd = jax.jit(lambda xx: linear_apply(xx, w_p, b_p, meta))

    out = jax.block_until_ready(fwd(x))

    # Reference check against plain JAX.
    ref = x @ weight.T + bias
    assert out.shape == (batch, output_size)
    assert jnp.allclose(out, ref, atol=1e-5, rtol=1e-5)

    print("KERNEL_OK")
</pallas_src>

<mosaic_0001>
module attributes {stable_mosaic.version = 11 : i64} {
  func.func @_linear_kernel_f32_out(%arg0: i32, %arg1: i32, %arg2: i32, %arg3: memref<8x128xf32, #tpu.memory_space<vmem>>, %arg4: memref<128x128xf32, #tpu.memory_space<vmem>>, %arg5: memref<1x128xf32, #tpu.memory_space<vmem>>, %arg6: memref<8x128xf32, #tpu.memory_space<vmem>>) attributes {dimension_semantics = [#tpu.dimension_semantics<parallel>, #tpu.dimension_semantics<parallel>, #tpu.dimension_semantics<arbitrary>], iteration_bounds = array<i64: 1, 1, 1>, scalar_prefetch = 0 : i64, scratch_operands = 0 : i64, tpu.core_type = #tpu.core_type<tc>, window_params = [{transform_indices = @transform_0, window_bounds = array<i64: 8, 128>}, {transform_indices = @transform_1, window_bounds = array<i64: 128, 128>}, {transform_indices = @transform_2, window_bounds = array<i64: 1, 128>}, {transform_indices = @transform_3, window_bounds = array<i64: 8, 128>}]} {
    %c0_i32 = arith.constant 0 : i32
    %0 = arith.cmpi eq, %arg2, %c0_i32 : i32
    %1 = arith.extui %0 : i1 to i32
    %c0_i32_0 = arith.constant 0 : i32
    %2 = arith.cmpi ne, %1, %c0_i32_0 : i32
    scf.if %2 {
      %c0_8 = arith.constant 0 : index
      %c0_9 = arith.constant 0 : index
      %9 = vector.load %arg5[%c0_8, %c0_9] : memref<1x128xf32, #tpu.memory_space<vmem>>, vector<1x128xf32>
      %10 = vector.shape_cast %9 : vector<1x128xf32> to vector<1x128xf32>
      %11 = vector.broadcast %10 : vector<1x128xf32> to vector<8x128xf32>
      %c0_10 = arith.constant 0 : index
      %c0_11 = arith.constant 0 : index
      %12 = vector.load %arg6[%c0_10, %c0_11] : memref<8x128xf32, #tpu.memory_space<vmem>>, vector<8x128xf32>
      tpu.vector_store %arg6[%c0_10, %c0_11], %11 {strides = array<i32>} : memref<8x128xf32, #tpu.memory_space<vmem>>, vector<8x128xf32>,
    } else {
    }
    %c0 = arith.constant 0 : index
    %c0_1 = arith.constant 0 : index
    %3 = vector.load %arg6[%c0, %c0_1] : memref<8x128xf32, #tpu.memory_space<vmem>>, vector<8x128xf32>
    %c0_2 = arith.constant 0 : index
    %c0_3 = arith.constant 0 : index
    %4 = vector.load %arg3[%c0_2, %c0_3] : memref<8x128xf32, #tpu.memory_space<vmem>>, vector<8x128xf32>
    %c0_4 = arith.constant 0 : index
    %c0_5 = arith.constant 0 : index
    %5 = vector.load %arg4[%c0_4, %c0_5] : memref<128x128xf32, #tpu.memory_space<vmem>>, vector<128x128xf32>
    %cst = arith.constant dense<0.000000e+00> : vector<8x128xf32>
    %6 = tpu.matmul %4, %5, %cst {dimension_numbers = #tpu.dot_dimension_numbers<[1], [0], [0], [1], [0, 0, 1, 1], [], []>} : vector<8x128xf32>, vector<128x128xf32>, vector<8x128xf32> -> vector<8x128xf32>
    %7 = arith.addf %3, %6 : vector<8x128xf32>
    %c0_6 = arith.constant 0 : index
    %c0_7 = arith.constant 0 : index
    %8 = vector.load %arg6[%c0_6, %c0_7] : memref<8x128xf32, #tpu.memory_space<vmem>>, vector<8x128xf32>
    tpu.vector_store %arg6[%c0_6, %c0_7], %7 {strides = array<i32>} : memref<8x128xf32, #tpu.memory_space<vmem>>, vector<8x128xf32>,
    return
  }
  func.func @transform_0(%arg0: i32, %arg1: i32, %arg2: i32) -> (i32, i32) {
    %c0_i32 = arith.constant 0 : i32
    return %arg0, %arg2 : i32, i32
  }
  func.func @transform_1(%arg0: i32, %arg1: i32, %arg2: i32) -> (i32, i32) {
    %c0_i32 = arith.constant 0 : i32
    return %arg2, %arg1 : i32, i32
  }
  func.func @transform_2(%arg0: i32, %arg1: i32, %arg2: i32) -> (i32, i32) {
    %c0_i32 = arith.constant 0 : i32
    %c0_i32_0 = arith.constant 0 : i32
    return %c0_i32, %arg1 : i32, i32
  }
  func.func @transform_3(%arg0: i32, %arg1: i32, %arg2: i32) -> (i32, i32) {
    %c0_i32 = arith.constant 0 : i32
    return %arg0, %arg1 : i32, i32
  }
}

</mosaic_0001>

<llo_original>
// kernel: _lambda_.1
$region0: #{_lambda_.1}
  #allocation0 [shape = 'u32[]', space=smem, size = 0x4, offset = 0x4, fixed_abs, tag = 'smem constant byte address 0x4 - core index']
  #allocation1 [shape = 'u32[72,128]{1,0:T(1,128)}', space=vmem, size = 0x9000, scoped, tag = 'internal scratch']
  %s0 = inlined_call_operand.vmem [shape: f32[8,128], index: 0, kind: input, shape index: {}]
  %s1 = inlined_call_operand.hbm [shape: f32[128,128], index: 1, kind: input, shape index: {}]
  %s2 = inlined_call_operand.vmem [shape: f32[1,128], index: 2, kind: input, shape index: {}]
  %s3 = inlined_call_operand.hbm [shape: f32[8,128], index: 3, kind: output, shape index: {}]
  %s4 = sld [smem:[#allocation0]]
  $region30: #{_lambda_.1} parent=0
    _
  %s6 = ssub.s32 1, %s4
  %s7 = scalar_select 0, %s6, %s4
  $region1: #{_lambda_.1} parent=0
    #allocation2 [shape = 'u8[65536]{0}', space=vmem, size = 0x10000, scoped, tag = 'input window, operand 1, single buffered']
    #allocation3 [shape = 's32[1]{0}', space=sflag, size = 0x4, scoped, tag = 'scoped memory for _lambda_.1']
    #allocation4 [shape = 's32[1]{0}', space=sflag, size = 0x4, scoped, tag = 'scoped memory for _lambda_.1']
    #allocation5 [shape = 'u8[4096]{0}', space=vmem, size = 0x1000, scoped, tag = 'output window, operand 0, single buffered']
    %8 = vsyncpa [#allocation3], 0
    %9 = vsyncpa [#allocation4], 0
    // Predicated region
    $region2: #{_lambda_.1} parent=1 // pred_check
      _
    $region3: #{_lambda_.1} parent=1 // pred_check_branch
      %11 = sbr.rel (0) target = $region5
    $region4: #{_lambda_.1} parent=1 // pred_region
      _
    $region5: #{_lambda_.1} parent=1 // pred_fallthru
      _
    // Predicated region
    $region6: #{_lambda_.1} parent=1 // pred_check
      _
    $region7: #{_lambda_.1} parent=1 // pred_check_branch
      %13 = sbr.rel (0) target = $region9
    $region8: #{_lambda_.1} parent=1 // pred_region
      %15 = vsyncadd [#allocation3], 0
      %s16 = sshll.u32 %s1, 4
      %s17 = int_to_ptr.hbm [resolvable:$true] %s16
      %s18 = sshll.u32 [#allocation2], 4
      %s19 = int_to_ptr.vmem [resolvable:$true] %s18
      %24 = dma.hbm_to_vmem [thread:$0]  %s17, 2048, %s19, [#allocation3], 128, 128, 8
    $region9: #{_lambda_.1} parent=1 // pred_fallthru
      _
    // Predicated region
    $region10: #{_lambda_.1} parent=1 // pred_check
      _
    $region11: #{_lambda_.1} parent=1 // pred_check_branch
      %26 = sbr.rel (0) target = $region13
    $region12: #{_lambda_.1} parent=1 // pred_region
      _
    $region13: #{_lambda_.1} parent=1 // pred_fallthru
      _
    // Predicated region
    $region14: #{_lambda_.1} parent=1 // pred_check
      _
    $region15: #{_lambda_.1} parent=1 // pred_check_branch
      %28 = sbr.rel (0) target = $region17
    $region16: #{_lambda_.1} parent=1 // pred_region
      %30 = dma.done [#allocation3], 2048
    $region17: #{_lambda_.1} parent=1 // pred_fallthru
      _
    %p31 = scmp.eq.s32.totalorder 0, 0
    // Predicated region
    $region18: #{_lambda_.1} parent=1 // pred_check
      %p32 = pneg %p31
    $region19: #{_lambda_.1} parent=1 // pred_check_branch
      %34 = sbr.rel (%p32) target = $region21
    $region20: #{_lambda_.1} parent=1 // pred_region
      %v35 = vld [vmem:[%s2] sm:$0x1]
      %v37 = vperm.slane %v35, 0
      %39 = vst [vmem:[#allocation5] sm:$0xff] %v37
    $region21: #{_lambda_.1} parent=1 // pred_fallthru
      _
    %v40 = vld [vmem:[#allocation5] sm:$0xff]
    %v41 = vld [vmem:[%s0] sm:$0xff]
    %v42 = vld [vmem:[#allocation2] sm:$0xff]
    %v43 = vld [vmem:[#allocation2 + $0x8] sm:$0xff]
    %v44 = vld [vmem:[#allocation2 + $0x10] sm:$0xff]
    %v45 = vld [vmem:[#allocation2 + $0x18] sm:$0xff]
    %v46 = vld [vmem:[#allocation2 + $0x20] sm:$0xff]
    %v47 = vld [vmem:[#allocation2 + $0x28] sm:$0xff]
    %v48 = vld [vmem:[#allocation2 + $0x30] sm:$0xff]
    %v49 = vld [vmem:[#allocation2 + $0x38] sm:$0xff]
    %v50 = vld [vmem:[#allocation2 + $0x40] sm:$0xff]
    %v51 = vld [vmem:[#allocation2 + $0x48] sm:$0xff]
    %v52 = vld [vmem:[#allocation2 + $0x50] sm:$0xff]
    %v53 = vld [vmem:[#allocation2 + $0x58] sm:$0xff]
    %v54 = vld [vmem:[#allocation2 + $0x60] sm:$0xff]
    %v55 = vld [vmem:[#allocation2 + $0x68] sm:$0xff]
    %v56 = vld [vmem:[#allocation2 + $0x70] sm:$0xff]
    %v57 = vld [vmem:[#allocation2 + $0x78] sm:$0xff]
    %58 = vmatpush.msra.mxu0 %v57
    %59 = vmatpush.msra.mxu0 %v56
    %60 = vmatpush.msra.mxu0 %v55
    %61 = vmatpush.msra.mxu0 %v54
    %62 = vmatpush.msra.mxu0 %v53
    %63 = vmatpush.msra.mxu0 %v52
    %64 = vmatpush.msra.mxu0 %v51
    %65 = vmatpush.msra.mxu0 %v50
    %66 = vmatpush.msra.mxu0 %v49
    %67 = vmatpush.msra.mxu0 %v48
    %68 = vmatpush.msra.mxu0 %v47
    %69 = vmatpush.msra.mxu0 %v46
    %70 = vmatpush.msra.mxu0 %v45
    %71 = vmatpush.msra.mxu0 %v44
    %72 = vmatpush.msra.mxu0 %v43
    %73 = vmatpush.msra.mxu0 %v42
    %74 = vmatmul.f32.gmra.mxu0 %v41
    %v75 = vpop.f32.mrf.mxu0
    %v76 = vadd.f32 0.0, %v75
    %77 = vdwg.mxu0
    %v78 = vadd.f32 %v40, %v76
    %79 = vst [vmem:[#allocation5] sm:$0xff] %v78
    // Predicated region
    $region22: #{_lambda_.1} parent=1 // pred_check
      _
    $region23: #{_lambda_.1} parent=1 // pred_check_branch
      %81 = sbr.rel (0) target = $region25
    $region24: #{_lambda_.1} parent=1 // pred_region
      %83 = vsyncadd [#allocation4], 0
      %s85 = sshll.u32 [#allocation5], 4
      %s86 = int_to_ptr.vmem [resolvable:$true] %s85
      %s87 = sshll.u32 %s3, 4
      %s88 = int_to_ptr.hbm [resolvable:$true] %s87
      %90 = dma.vmem_to_hbm [thread:$0]  %s86, 128, %s88, [#allocation4]
    $region25: #{_lambda_.1} parent=1 // pred_fallthru
      _
    // Predicated region
    $region26: #{_lambda_.1} parent=1 // pred_check
      _
    $region27: #{_lambda_.1} parent=1 // pred_check_branch
      %92 = sbr.rel (0) target = $region29
    $region28: #{_lambda_.1} parent=1 // pred_region
      %94 = dma.done [#allocation4], 128
    $region29: #{_lambda_.1} parent=1 // pred_fallthru
      _
    %95 = vsyncpa [#allocation3], 1
    %96 = vsyncpa [#allocation4], 1

</llo_original>
